<compile_context>
chip_gen: v7x
topology: tpu7x:2x2x1
jax: 0.10.0
libtpu: 0.0.40
codegen_flags: <defaults>
</compile_context>

<pallas_src>
import numpy as np
import jax
import jax.numpy as jnp
from jax.experimental import pallas as pl
from jax.experimental.pallas import tpu as pltpu

_VMEM_BUDGET = 64 * 1024 * 1024   # per-TensorCore design budget (v7x physical; <= v5e/v6e)


def _round_up(x, m):
    return (x + m - 1) // m * m


def _pad2(a, shape):
    return jnp.pad(a, ((0, shape[0] - a.shape[0]), (0, shape[1] - a.shape[1])))


def _pick_out_tile(out_p, target):
    """Largest multiple-of-128 divisor of out_p that is <= target (out_p is a 128-multiple)."""
    k = out_p // 128
    best = 1
    for d in range(1, k + 1):
        if k % d == 0 and d * 128 <= target:
            best = d
    return best * 128


# ----------------------------- kernels (pure MXU work) -----------------------------

def _lowrank_kernel(x_ref, v_ref, ut_ref, o_ref):
    # ((x @ (V*s)) @ U^T) — s folded into V and U transposed at init; cast x in-kernel.
    x = x_ref[...].astype(v_ref.dtype)
    t = jnp.dot(x, v_ref[...], preferred_element_type=jnp.float32)          # (tb, R_p) f32
    o_ref[...] = jnp.dot(t.astype(ut_ref.dtype), ut_ref[...],
                         preferred_element_type=jnp.float32).astype(o_ref.dtype)


def _dense_kernel(x_ref, wt_ref, o_ref):
    # Single matmul against the reconstructed (padded) W^T tile.
    x = x_ref[...].astype(wt_ref.dtype)
    o_ref[...] = jnp.dot(x, wt_ref[...],
                         preferred_element_type=jnp.float32).astype(o_ref.dtype)


# ------------------------------- module equivalent ---------------------------------

class LowRankHead:
    """JAX/Pallas equivalent of LowRankLayer (the child that rank_dict replaces).

    Init time: truncated-SVD factors are folded/transposed/zero-padded ONCE (this mirrors
    LowRankLayer.__init__, which runs torch.svd once). Call time: a single pallas_call.
    """

    def __init__(self, u_approx, s_approx, v_approx, *,
                 compute_dtype=jnp.bfloat16, use_dense=None):
        OUT, R = u_approx.shape
        IN, R2 = v_approx.shape
        assert R2 == R, "u_approx and v_approx rank mismatch"

        self.IN, self.OUT, self.R = IN, OUT, R
        self.compute_dtype = compute_dtype
        self.IN_p = _round_up(IN, 128)
        self.OUT_p = _round_up(OUT, 128)
        self.R_p = _round_up(R, 128)

        if use_dense is None:
            # Decide on PADDED geometry: R is padded to >=128 on the lane axis, so the real
            # low-rank cost is R_p-based.
            use_dense = (self.IN_p + self.OUT_p) * self.R_p >= self.IN_p * self.OUT_p
        self.use_dense = bool(use_dense)

        s = jnp.reshape(s_approx, (R,)).astype(jnp.float32)
        u32 = u_approx.astype(jnp.float32)
        v32 = v_approx.astype(jnp.float32)

        if self.use_dense:
            # W^T = V diag(s) U^T : (IN, OUT), reconstructed ONCE at init.
            w_t = (v32 * s[None, :]) @ u32.T
            self.w_t = _pad2(w_t.astype(compute_dtype), (self.IN_p, self.OUT_p))
            self.v_scaled = None
            self.u_t = None
        else:
            # Fold s into V (in f32, then cast), pre-transpose U; pad to lane-dense shapes.
            self.v_scaled = _pad2((v32 * s[None, :]).astype(compute_dtype),
                                  (self.IN_p, self.R_p))                    # (IN_p, R_p)
            self.u_t = _pad2(u32.T.astype(compute_dtype),
                             (self.R_p, self.OUT_p))                        # (R_p, OUT_p)
            self.w_t = None

    @classmethod
    def from_linear_weight(cls, weight, rank, **kwargs):
        """Mirror LowRankLayer.__init__: truncated SVD of an nn.Linear weight (OUT, IN)."""
        u, s, vh = np.linalg.svd(np.asarray(weight, dtype=np.float32), full_matrices=False)
        return cls(jnp.asarray(u[:, :rank]), jnp.asarray(s[:rank]),
                   jnp.asarray(vh.T[:, :rank]), **kwargs)

    def __call__(self, x):
        B, IN = x.shape
        assert IN == self.IN
        cd = self.compute_dtype
        w_is = jnp.dtype(cd).itemsize
        x_is = jnp.dtype(x.dtype).itemsize
        out_is = w_is
        IN_p, OUT_p, R_p = self.IN_p, self.OUT_p, self.R_p
        budget = _VMEM_BUDGET

        # ---- batch tile: big (amortize ~0.35us/step), 16-row aligned for bf16 sublanes ----
        tb = min(512, _round_up(B, 16))
        while tb > 16 and 2 * tb * IN_p * x_is > budget // 3:
            tb = _round_up(tb // 2, 16)
        B_p = _round_up(B, tb)
        n_b = B_p // tb

        # ---- OUT tile: VMEM-bounded; split when batch alone can't feed both v7x cores ----
        w_rows = IN_p if self.use_dense else R_p
        target = min(OUT_p, 512)
        while target > 128 and 2 * w_rows * target * w_is > budget // 3:
            target = max(128, target // 2)
        if n_b < 2 and OUT_p >= 256:
            target = min(target, OUT_p // 2)
        to = _pick_out_tile(OUT_p, max(128, target))
        n_o = OUT_p // to

        # ---- activation: no zeros+scatter pass; pad only if ragged, cast in-kernel ----
        if B_p != B or IN_p != IN:
            x_in = jnp.pad(x, ((0, B_p - B), (0, IN_p - IN)))
        else:
            x_in = x

        x_spec = pl.BlockSpec((tb, IN_p), lambda i, j: (i, 0))
        out_spec = pl.BlockSpec((tb, to), lambda i, j: (i, j))
        out_shape = jax.ShapeDtypeStruct((B_p, OUT_p), cd)      # bf16 writeback

        vmem_need = 2 * tb * IN_p * x_is + 2 * tb * to * out_is
        if self.use_dense:
            vmem_need += 2 * IN_p * to * w_is
            flops = 2 * B_p * IN_p * OUT_p
            bytes_accessed = (B_p * IN_p * x_is + n_b * IN_p * OUT_p * w_is
                              + B_p * OUT_p * out_is)
            kernel = _dense_kernel
            w_args = (self.w_t,)
            w_specs = [pl.BlockSpec((IN_p, to), lambda i, j: (0, j))]
        else:
            vmem_need += 2 * (IN_p * R_p + R_p * to) * w_is
            flops = 2 * B_p * R_p * (n_o * IN_p + OUT_p)   # x@V recomputed per OUT tile (cheap)
            bytes_accessed = (B_p * IN_p * x_is + IN_p * R_p * w_is
                              + n_b * R_p * OUT_p * w_is + B_p * OUT_p * out_is)
            kernel = _lowrank_kernel
            w_args = (self.v_scaled, self.u_t)
            w_specs = [pl.BlockSpec((IN_p, R_p), lambda i, j: (0, 0)),   # V*s, resident
                       pl.BlockSpec((R_p, to), lambda i, j: (0, j))]     # U^T, OUT-tiled

        vmem_limit = int(min(budget, max(32 * 1024 * 1024, 2 * vmem_need)))
        cparams = pltpu.CompilerParams(
            dimension_semantics=("parallel", "parallel"),
            vmem_limit_bytes=vmem_limit)
        cost = pl.CostEstimate(flops=int(flops), transcendentals=0,
                               bytes_accessed=int(bytes_accessed))

        out = pl.pallas_call(
            kernel,
            out_shape=out_shape,
            grid_spec=pltpu.PrefetchScalarGridSpec(
                num_scalar_prefetch=0,
                grid=(n_b, n_o),
                in_specs=[x_spec, *w_specs],
                out_specs=out_spec),
            compiler_params=cparams,
            cost_estimate=cost,
        )(x_in, *w_args)

        # Slice away batch / output padding (returns compute_dtype).
        return out[:B, :self.OUT]


def lowrank_wrapper_forward(x, head: LowRankHead):
    # LowRankWrapper.forward(x) == pretrained_model(x) with 'head' replaced by LowRankLayer.
    # TODO(synk): the ViT backbone (other children of pretrained_model) is external to this
    # module spec; only the rank_dict-targeted head is implemented here.
    return head(x)


if __name__ == "__main__":
    # Small, ViT-head-like shapes.
    B, IN, OUT = 8, 128, 64
    rank_dict = {"head": 50}
    RANK = rank_dict["head"]

    key = jax.random.PRNGKey(0)
    kx, kw = jax.random.split(key)

    # Deterministic synthetic "pretrained" head weight; truncated SVD mirrors
    # LowRankLayer.__init__ (torch.svd of original_layer.weight — init-time only).
    W = 0.02 * jax.random.normal(kw, (OUT, IN), dtype=jnp.float32)
    x = jax.random.normal(kx, (B, IN), dtype=jnp.float32)

    u_full, s_full, vh_full = np.linalg.svd(np.asarray(W), full_matrices=False)
    u_approx = jnp.asarray(u_full[:, :RANK])        # (OUT, RANK)
    s_approx = jnp.asarray(s_full[:RANK])           # (RANK,)
    v_approx = jnp.asarray(vh_full.T[:, :RANK])     # (IN, RANK)  (torch.svd returns V, not V^T)

    # Pure-JAX f32 reference of the exact PyTorch forward (bias-free F.linear).
    approx_weight = u_approx @ jnp.diag(s_approx) @ v_approx.T   # (OUT, IN)
    ref = np.asarray(x @ approx_weight.T, dtype=np.float32)      # (B, OUT)

    # Low-rank two-matmul path (the regime of a real ViT head: (IN_p+OUT_p)*R_p << IN_p*OUT_p).
    head_lr = LowRankHead(u_approx, s_approx, v_approx, use_dense=False)
    out_lr = jax.block_until_ready(lowrank_wrapper_forward(x, head_lr))
    np.testing.assert_allclose(np.asarray(out_lr.astype(jnp.float32)), ref,
                               rtol=2e-2, atol=1e-2)

    # Auto path (padded-geometry heuristic selects the dense single-matmul for this tiny head);
    # also exercises the from_linear_weight init (SVD done once, at construction).
    head_auto = LowRankHead.from_linear_weight(W, RANK)
    out_auto = jax.block_until_ready(lowrank_wrapper_forward(x, head_auto))
    np.testing.assert_allclose(np.asarray(out_auto.astype(jnp.float32)), ref,
                               rtol=2e-2, atol=1e-2)

    print("KERNEL_OK")
</pallas_src>

<mosaic_0001>
module attributes {stable_mosaic.version = 11 : i64} {
  func.func @_lowrank_kernel(%arg0: i32, %arg1: i32, %arg2: memref<16x128xf32, #tpu.memory_space<vmem>>, %arg3: memref<128x128xbf16, #tpu.memory_space<vmem>>, %arg4: memref<128x128xbf16, #tpu.memory_space<vmem>>, %arg5: memref<16x128xbf16, #tpu.memory_space<vmem>>) attributes {dimension_semantics = [#tpu.dimension_semantics<parallel>, #tpu.dimension_semantics<parallel>], iteration_bounds = array<i64: 1, 1>, scalar_prefetch = 0 : i64, scratch_operands = 0 : i64, tpu.core_type = #tpu.core_type<tc>, window_params = [{transform_indices = @transform_0, window_bounds = array<i64: 16, 128>}, {pipeline_mode = #tpu.pipeline_mode<synchronous>, transform_indices = @transform_1, window_bounds = array<i64: 128, 128>}, {transform_indices = @transform_2, window_bounds = array<i64: 128, 128>}, {transform_indices = @transform_3, window_bounds = array<i64: 16, 128>}]} {
    %c0 = arith.constant 0 : index
    %c0_0 = arith.constant 0 : index
    %0 = vector.load %arg2[%c0, %c0_0] : memref<16x128xf32, #tpu.memory_space<vmem>>, vector<16x128xf32>
    %1 = arith.truncf %0 : vector<16x128xf32> to vector<16x128xbf16>
    %c0_1 = arith.constant 0 : index
    %c0_2 = arith.constant 0 : index
    %2 = vector.load %arg3[%c0_1, %c0_2] : memref<128x128xbf16, #tpu.memory_space<vmem>>, vector<128x128xbf16>
    %cst = arith.constant dense<0.000000e+00> : vector<16x128xf32>
    %3 = tpu.matmul %1, %2, %cst {dimension_numbers = #tpu.dot_dimension_numbers<[1], [0], [0], [1], [0, 0, 1, 1], [], []>} : vector<16x128xbf16>, vector<128x128xbf16>, vector<16x128xf32> -> vector<16x128xf32>
    %4 = arith.truncf %3 : vector<16x128xf32> to vector<16x128xbf16>
    %c0_3 = arith.constant 0 : index
    %c0_4 = arith.constant 0 : index
    %5 = vector.load %arg4[%c0_3, %c0_4] : memref<128x128xbf16, #tpu.memory_space<vmem>>, vector<128x128xbf16>
    %cst_5 = arith.constant dense<0.000000e+00> : vector<16x128xf32>
    %6 = tpu.matmul %4, %5, %cst_5 {dimension_numbers = #tpu.dot_dimension_numbers<[1], [0], [0], [1], [0, 0, 1, 1], [], []>} : vector<16x128xbf16>, vector<128x128xbf16>, vector<16x128xf32> -> vector<16x128xf32>
    %7 = arith.truncf %6 : vector<16x128xf32> to vector<16x128xbf16>
    %c0_6 = arith.constant 0 : index
    %c0_7 = arith.constant 0 : index
    %8 = vector.load %arg5[%c0_6, %c0_7] : memref<16x128xbf16, #tpu.memory_space<vmem>>, vector<16x128xbf16>
    tpu.vector_store %arg5[%c0_6, %c0_7], %7 {strides = array<i32>} : memref<16x128xbf16, #tpu.memory_space<vmem>>, vector<16x128xbf16>,
    return
  }
  func.func @transform_0(%arg0: i32, %arg1: i32) -> (i32, i32) {
    %c0_i32 = arith.constant 0 : i32
    %c0_i32_0 = arith.constant 0 : i32
    return %arg0, %c0_i32 : i32, i32
  }
  func.func @transform_1(%arg0: i32, %arg1: i32) -> (i32, i32) {
    %c0_i32 = arith.constant 0 : i32
    %c0_i32_0 = arith.constant 0 : i32
    %c0_i32_1 = arith.constant 0 : i32
    return %c0_i32, %c0_i32_0 : i32, i32
  }
  func.func @transform_2(%arg0: i32, %arg1: i32) -> (i32, i32) {
    %c0_i32 = arith.constant 0 : i32
    %c0_i32_0 = arith.constant 0 : i32
    return %c0_i32, %arg1 : i32, i32
  }
  func.func @transform_3(%arg0: i32, %arg1: i32) -> (i32, i32) {
    %c0_i32 = arith.constant 0 : i32
    return %arg0, %arg1 : i32, i32
  }
}

</mosaic_0001>

<llo_original>
// kernel: tpu_custom_call.1
$region0: #{tpu_custom_call.1}
  #allocation0 [shape = 'u32[]', space=smem, size = 0x4, offset = 0x4, fixed_abs, tag = 'smem constant byte address 0x4 - core index']
  #allocation1 [shape = 'u32[144,128]{1,0:T(1,128)}', space=vmem, size = 0x12000, scoped, tag = 'internal scratch']
  %s0 = inlined_call_operand.hbm [shape: f32[16,128], index: 0, kind: input, shape index: {}]
  %s1 = inlined_call_operand.hbm [shape: bf16[128,128], index: 1, kind: input, shape index: {}]
  %s2 = inlined_call_operand.hbm [shape: bf16[128,128], index: 2, kind: input, shape index: {}]
  %s3 = inlined_call_operand.hbm [shape: bf16[16,128], index: 3, kind: output, shape index: {}]
  %s4 = sld [smem:[#allocation0]]
  $region34: #{tpu_custom_call.1} parent=0
    _
  %s6 = ssub.s32 1, %s4
  %s7 = scalar_select 0, %s6, %s4
  $region1: #{tpu_custom_call.1} parent=0
    #allocation2 [shape = 'u8[8192]{0}', space=vmem, size = 0x2000, scoped, tag = 'input window, operand 0, single buffered']
    #allocation3 [shape = 's32[1]{0}', space=sflag, size = 0x4, scoped, tag = 'scoped memory for tpu_custom_call.1']
    #allocation4 [shape = 's32[1]{0}', space=sflag, size = 0x4, scoped, tag = 'scoped memory for tpu_custom_call.1']
    #allocation5 [shape = 'u8[32768]{0}', space=vmem, size = 0x8000, scoped, tag = 'input window, operand 1, single buffered']
    #allocation6 [shape = 's32[1]{0}', space=sflag, size = 0x4, scoped, tag = 'scoped memory for tpu_custom_call.1']
    #allocation7 [shape = 'u8[32768]{0}', space=vmem, size = 0x8000, scoped, tag = 'input window, operand 2, single buffered']
    #allocation8 [shape = 'u8[4096]{0}', space=vmem, size = 0x1000, scoped, tag = 'output window, operand 0, single buffered']
    %8 = vsyncpa [#allocation3], 0
    %9 = vsyncpa [#allocation6], 0
    %10 = vsyncpa [#allocation4], 0
    // Predicated region
    $region2: #{tpu_custom_call.1} parent=1 // pred_check
      _
    $region3: #{tpu_custom_call.1} parent=1 // pred_check_branch
      %12 = sbr.rel (0) target = $region5
    $region4: #{tpu_custom_call.1} parent=1 // pred_region
      %s14 = ssub.s32 256, 256
      %15 = vsyncadd [#allocation3], %s14
      %s16 = sshll.u32 [#allocation2], 4
      %s17 = int_to_ptr.vmem [resolvable:$true] %s16
      %22 = dma.hbm_to_vmem [thread:$0]  %s0, 256, %s17, [#allocation3], 128, 128, 8
    $region5: #{tpu_custom_call.1} parent=1 // pred_fallthru
      _
    // Predicated region
    $region6: #{tpu_custom_call.1} parent=1 // pred_check
      _
    $region7: #{tpu_custom_call.1} parent=1 // pred_check_branch
      %24 = sbr.rel (0) target = $region9
    $region8: #{tpu_custom_call.1} parent=1 // pred_region
      %s26 = ssub.s32 1024, 1024
      %27 = vsyncadd [#allocation6], %s26
      %s28 = sshll.u32 [#allocation5], 4
      %s29 = int_to_ptr.vmem [resolvable:$true] %s28
      %34 = dma.hbm_to_vmem [thread:$0]  %s1, 1024, %s29, [#allocation6], 64, 64, 4
    $region9: #{tpu_custom_call.1} parent=1 // pred_fallthru
      _
    // Predicated region
    $region10: #{tpu_custom_call.1} parent=1 // pred_check
      _
    $region11: #{tpu_custom_call.1} parent=1 // pred_check_branch
      %36 = sbr.rel (0) target = $region13
    $region12: #{tpu_custom_call.1} parent=1 // pred_region
      %s38 = ssub.s32 1024, 1024
      %39 = vsyncadd [#allocation6], %s38
      %s40 = sshll.u32 [#allocation7], 4
      %s41 = int_to_ptr.vmem [resolvable:$true] %s40
      %46 = dma.hbm_to_vmem [thread:$0]  %s2, 1024, %s41, [#allocation6], 64, 64, 4
    $region13: #{tpu_custom_call.1} parent=1 // pred_fallthru
      _
    // Predicated region
    $region14: #{tpu_custom_call.1} parent=1 // pred_check
      _
    $region15: #{tpu_custom_call.1} parent=1 // pred_check_branch
      %48 = sbr.rel (0) target = $region17
    $region16: #{tpu_custom_call.1} parent=1 // pred_region
      %49 = dma.done [#allocation3], 256
    $region17: #{tpu_custom_call.1} parent=1 // pred_fallthru
      _
    // Predicated region
    $region18: #{tpu_custom_call.1} parent=1 // pred_check
      _
    $region19: #{tpu_custom_call.1} parent=1 // pred_check_branch
      %51 = sbr.rel (0) target = $region21
    $region20: #{tpu_custom_call.1} parent=1 // pred_region
      %52 = dma.done [#allocation6], 1024
    $region21: #{tpu_custom_call.1} parent=1 // pred_fallthru
      _
    // Predicated region
    $region22: #{tpu_custom_call.1} parent=1 // pred_check
      _
    $region23: #{tpu_custom_call.1} parent=1 // pred_check_branch
      %54 = sbr.rel (0) target = $region25
    $region24: #{tpu_custom_call.1} parent=1 // pred_region
      %55 = dma.done [#allocation6], 1024
    $region25: #{tpu_custom_call.1} parent=1 // pred_fallthru
      _
    %v57 = vld [vmem:[#allocation2] sm:$0xff]
    %v58 = vld [vmem:[#allocation2 + $0x8] sm:$0xff]
    %v59 = vpack.c.bf16 %v58, %v57
    %v60 = vld [vmem:[#allocation5] sm:$0xf]
    %v61 = vld [vmem:[#allocation5 + $0x4] sm:$0xf]
    %v62 = vld [vmem:[#allocation5 + $0x8] sm:$0xf]
    %v63 = vld [vmem:[#allocation5 + $0xc] sm:$0xf]
    %v64 = vld [vmem:[#allocation5 + $0x10] sm:$0xf]
    %v65 = vld [vmem:[#allocation5 + $0x14] sm:$0xf]
    %v66 = vld [vmem:[#allocation5 + $0x18] sm:$0xf]
    %v67 = vld [vmem:[#allocation5 + $0x1c] sm:$0xf]
    %v68 = vld [vmem:[#allocation5 + $0x20] sm:$0xf]
    %v69 = vld [vmem:[#allocation5 + $0x24] sm:$0xf]
    %v70 = vld [vmem:[#allocation5 + $0x28] sm:$0xf]
    %v71 = vld [vmem:[#allocation5 + $0x2c] sm:$0xf]
    %v72 = vld [vmem:[#allocation5 + $0x30] sm:$0xf]
    %v73 = vld [vmem:[#allocation5 + $0x34] sm:$0xf]
    %v74 = vld [vmem:[#allocation5 + $0x38] sm:$0xf]
    %v75 = vld [vmem:[#allocation5 + $0x3c] sm:$0xf]
    %v92 = vunpack.c.l.b16 %v60
    %v93 = vunpack.c.l.b16 %v61
    %v94 = vunpack.c.l.b16 %v62
    %v95 = vunpack.c.l.b16 %v63
    %v96 = vunpack.c.l.b16 %v64
    %v97 = vunpack.c.l.b16 %v65
    %v98 = vunpack.c.l.b16 %v66
    %v99 = vunpack.c.l.b16 %v67
    %v100 = vunpack.c.l.b16 %v68
    %v101 = vunpack.c.l.b16 %v69
    %v102 = vunpack.c.l.b16 %v70
    %v103 = vunpack.c.l.b16 %v71
    %v104 = vunpack.c.l.b16 %v72
    %v105 = vunpack.c.l.b16 %v73
    %v106 = vunpack.c.l.b16 %v74
    %v107 = vunpack.c.l.b16 %v75
    %v108 = vpack.c.b16 %v93, %v92
    %v109 = vpack.c.b16 %v95, %v94
    %v110 = vpack.c.b16 %v97, %v96
    %v111 = vpack.c.b16 %v99, %v98
    %v112 = vpack.c.b16 %v101, %v100
    %v113 = vpack.c.b16 %v103, %v102
    %v114 = vpack.c.b16 %v105, %v104
    %v115 = vpack.c.b16 %v107, %v106
    %124 = vmatprep.subr.bf16.mxu0 0
    %125 = vmatpush1.bf16.msra.mxu0 %v108
    %126 = vmatprep.subr.bf16.mxu0 0
    %127 = vmatpush1.bf16.msra.mxu0 %v109
    %128 = vmatprep.subr.bf16.mxu0 0
    %129 = vmatpush1.bf16.msra.mxu0 %v110
    %130 = vmatprep.subr.bf16.mxu0 0
    %131 = vmatpush1.bf16.msra.mxu0 %v111
    %132 = vmatprep.subr.bf16.mxu0 0
    %133 = vmatpush1.bf16.msra.mxu0 %v112
    %134 = vmatprep.subr.bf16.mxu0 0
    %135 = vmatpush1.bf16.msra.mxu0 %v113
    %136 = vmatprep.subr.bf16.mxu0 0
    %137 = vmatpush1.bf16.msra.mxu0 %v114
    %138 = vmatprep.subr.bf16.mxu0 0
    %139 = vmatpush1.bf16.msra.mxu0 %v115
    %140 = vmatprep.subr.bf16.mxu0 0
    %141 = vmatpush1.bf16.msra.mxu0 0
    %142 = vmatprep.subr.bf16.mxu0 0
    %143 = vmatpush1.bf16.msra.mxu0 0
    %144 = vmatprep.subr.bf16.mxu0 0
    %145 = vmatpush1.bf16.msra.mxu0 0
    %146 = vmatprep.subr.bf16.mxu0 0
    %147 = vmatpush1.bf16.msra.mxu0 0
    %148 = vmatprep.subr.bf16.mxu0 0
    %149 = vmatpush1.bf16.msra.mxu0 0
    %150 = vmatprep.subr.bf16.mxu0 0
    %151 = vmatpush1.bf16.msra.mxu0 0
    %152 = vmatprep.subr.bf16.mxu0 0
    %153 = vmatpush1.bf16.msra.mxu0 0
    %154 = vmatprep.subr.bf16.mxu0 0
    %155 = vmatpush1.bf16.msra.mxu0 0
    %156 = vmatprep.mubr.bf16.mxu0 0
    %157 = vmatmul.mubr.bf16.gmra.mrb[0].mxu0 %v59
    %v158 = vpop.f32.mrb[0].mxu0
    %v159 = vadd.f32 0.0, %v158
    %v160 = vpop.f32.mrb[0].mxu0
    %v161 = vpop.f32.mrb[0].mxu0
    %v162 = vadd.f32 0.0, %v161
    %v163 = vpop.f32.mrb[0].mxu0
    %164 = vdwg.mxu0
    %v165 = vpack.c.bf16 %v162, %v159
    %v166 = vld [vmem:[#allocation7] sm:$0xf]
    %v167 = vld [vmem:[#allocation7 + $0x4] sm:$0xf]
    %v168 = vld [vmem:[#allocation7 + $0x8] sm:$0xf]
    %v169 = vld [vmem:[#allocation7 + $0xc] sm:$0xf]
    %v170 = vld [vmem:[#allocation7 + $0x10] sm:$0xf]
    %v171 = vld [vmem:[#allocation7 + $0x14] sm:$0xf]
    %v172 = vld [vmem:[#allocation7 + $0x18] sm:$0xf]
    %v173 = vld [vmem:[#allocation7 + $0x1c] sm:$0xf]
    %v174 = vld [vmem:[#allocation7 + $0x20] sm:$0xf]
    %v175 = vld [vmem:[#allocation7 + $0x24] sm:$0xf]
    %v176 = vld [vmem:[#allocation7 + $0x28] sm:$0xf]
    %v177 = vld [vmem:[#allocation7 + $0x2c] sm:$0xf]
    %v178 = vld [vmem:[#allocation7 + $0x30] sm:$0xf]
    %v179 = vld [vmem:[#allocation7 + $0x34] sm:$0xf]
    %v180 = vld [vmem:[#allocation7 + $0x38] sm:$0xf]
    %v181 = vld [vmem:[#allocation7 + $0x3c] sm:$0xf]
    %v198 = vunpack.c.l.b16 %v166
    %v199 = vunpack.c.l.b16 %v167
    %v200 = vunpack.c.l.b16 %v168
    %v201 = vunpack.c.l.b16 %v169
    %v202 = vunpack.c.l.b16 %v170
    %v203 = vunpack.c.l.b16 %v171
    %v204 = vunpack.c.l.b16 %v172
    %v205 = vunpack.c.l.b16 %v173
    %v206 = vunpack.c.l.b16 %v174
    %v207 = vunpack.c.l.b16 %v175
    %v208 = vunpack.c.l.b16 %v176
    %v209 = vunpack.c.l.b16 %v177
    %v210 = vunpack.c.l.b16 %v178
    %v211 = vunpack.c.l.b16 %v179
    %v212 = vunpack.c.l.b16 %v180
    %v213 = vunpack.c.l.b16 %v181
    %v214 = vpack.c.b16 %v199, %v198
    %v215 = vpack.c.b16 %v201, %v200
    %v216 = vpack.c.b16 %v203, %v202
    %v217 = vpack.c.b16 %v205, %v204
    %v218 = vpack.c.b16 %v207, %v206
    %v219 = vpack.c.b16 %v209, %v208
    %v220 = vpack.c.b16 %v211, %v210
    %v221 = vpack.c.b16 %v213, %v212
    %230 = vmatprep.subr.bf16.mxu0 0
    %231 = vmatpush1.bf16.msra.mxu0 %v214
    %232 = vmatprep.subr.bf16.mxu0 0
    %233 = vmatpush1.bf16.msra.mxu0 %v215
    %234 = vmatprep.subr.bf16.mxu0 0
    %235 = vmatpush1.bf16.msra.mxu0 %v216
    %236 = vmatprep.subr.bf16.mxu0 0
    %237 = vmatpush1.bf16.msra.mxu0 %v217
    %238 = vmatprep.subr.bf16.mxu0 0
    %239 = vmatpush1.bf16.msra.mxu0 %v218
    %240 = vmatprep.subr.bf16.mxu0 0
    %241 = vmatpush1.bf16.msra.mxu0 %v219
    %242 = vmatprep.subr.bf16.mxu0 0
    %243 = vmatpush1.bf16.msra.mxu0 %v220
    %244 = vmatprep.subr.bf16.mxu0 0
    %245 = vmatpush1.bf16.msra.mxu0 %v221
    %246 = vmatprep.subr.bf16.mxu0 0
    %247 = vmatpush1.bf16.msra.mxu0 0
    %248 = vmatprep.subr.bf16.mxu0 0
    %249 = vmatpush1.bf16.msra.mxu0 0
    %250 = vmatprep.subr.bf16.mxu0 0
    %251 = vmatpush1.bf16.msra.mxu0 0
    %252 = vmatprep.subr.bf16.mxu0 0
    %253 = vmatpush1.bf16.msra.mxu0 0
    %254 = vmatprep.subr.bf16.mxu0 0
    %255 = vmatpush1.bf16.msra.mxu0 0
    %256 = vmatprep.subr.bf16.mxu0 0
    %257 = vmatpush1.bf16.msra.mxu0 0
    %258 = vmatprep.subr.bf16.mxu0 0
    %259 = vmatpush1.bf16.msra.mxu0 0
    %260 = vmatprep.subr.bf16.mxu0 0
    %261 = vmatpush1.bf16.msra.mxu0 0
    %262 = vmatprep.mubr.bf16.mxu0 0
    %263 = vmatmul.mubr.bf16.gmra.mrb[0].mxu0 %v165
    %v264 = vpop.f32.mrb[0].mxu0
    %v265 = vadd.f32 0.0, %v264
    %v266 = vpop.f32.mrb[0].mxu0
    %v267 = vpop.f32.mrb[0].mxu0
    %v268 = vadd.f32 0.0, %v267
    %v269 = vpop.f32.mrb[0].mxu0
    %270 = vdwg.mxu0
    %v271 = vpack.c.bf16 %v268, %v265
    %v273 = vunpack.c.l.b16 %v271
    %v274 = vunpack.c.h.b16 %v271
    %v275 = vpack.c.b16 %v273, %v273
    %v276 = vpack.c.b16 %v274, %v274
    %279 = vst [vmem:[#allocation8] sm:$0xf] %v275
    %280 = vst [vmem:[#allocation8 + $0x4] sm:$0xf] %v276
    // Predicated region
    $region26: #{tpu_custom_call.1} parent=1 // pred_check
      _
    $region27: #{tpu_custom_call.1} parent=1 // pred_check_branch
      %282 = sbr.rel (0) target = $region29
    $region28: #{tpu_custom_call.1} parent=1 // pred_region
      %s284 = ssub.s32 128, 128
      %285 = vsyncadd [#allocation4], %s284
      %s286 = sshll.u32 [#allocation8], 4
      %s287 = int_to_ptr.vmem [resolvable:$true] %s286
      %292 = dma.vmem_to_hbm [thread:$0]  %s287, 128, %s3, [#allocation4], 64, 64, 4
    $region29: #{tpu_custom_call.1} parent=1 // pred_fallthru
      _
    // Predicated region
    $region30: #{tpu_custom_call.1} parent=1 // pred_check
      _
    $region31: #{tpu_custom_call.1} parent=1 // pred_check_branch
      %294 = sbr.rel (0) target = $region33
    $region32: #{tpu_custom_call.1} parent=1 // pred_region
      %295 = dma.done [#allocation4], 128
    $region33: #{tpu_custom_call.1} parent=1 // pred_fallthru
      _
    %296 = vsyncpa [#allocation3], 1
    %297 = vsyncpa [#allocation6], 1
    %298 = vsyncpa [#allocation4], 1

</llo_original>
